<compile_context>
chip_gen: v7x
topology: tpu7x:2x2x1
jax: 0.10.0
libtpu: 0.0.40
codegen_flags: <defaults>
</compile_context>

<pallas_src>
import functools

import jax
import jax.numpy as jnp
from jax.experimental import pallas as pl
from jax.experimental.pallas import tpu as pltpu

NEG_SLOPE = 0.01   # nn.LeakyReLU() default negative_slope
BN_EPS = 1e-5      # nn.BatchNorm1d default eps
LANE = 128


def _round_up(n, m=LANE):
    return ((n + m - 1) // m) * m


def _ffnn_kernel(num_hidden_layers, inv_batch, *refs):
    # refs layout:
    #   x, w_in, g_in, b_in, (w_l, g_l, b_l) * num_hidden_layers, w_out, o
    x_ref = refs[0]
    w_in_ref, g_in_ref, b_in_ref = refs[1], refs[2], refs[3]

    def dense(h, w_ref):
        # f32 operands / f32 accumulation on the MXU (matches nn.Linear).
        return jnp.dot(h, w_ref[...], preferred_element_type=jnp.float32)

    def leaky_relu(h):
        # one vmul + one vmax instead of compare + select
        return jnp.maximum(h, NEG_SLOPE * h)

    def batch_norm_train(h, g_ref, b_ref):
        # Fused single-pass statistics: one sublane reduction over the
        # lane-concatenated [h | h*h] yields sum(h) and sum(h^2) together.
        # Zero pad-rows add nothing; divisor is the true batch size.
        hcols = h.shape[1]
        sums = jnp.sum(jnp.concatenate([h, h * h], axis=1),
                       axis=0, keepdims=True)                 # [1, 2H]
        mean = sums[:, :hcols] * inv_batch                    # [1, H]
        ex2 = sums[:, hcols:] * inv_batch                     # [1, H]
        var = ex2 - mean * mean                               # biased variance
        scale = g_ref[...] * jax.lax.rsqrt(var + BN_EPS)      # rsqrt on EUP
        shift = b_ref[...] - mean * scale
        return h * scale + shift                              # one mul + one add on [B, H]

    # dense_in -> leaky_relu -> batch_norm_in
    h = batch_norm_train(leaky_relu(dense(x_ref[...], w_in_ref)),
                         g_in_ref, b_in_ref)

    idx = 4
    for _ in range(num_hidden_layers):
        w_ref, g_ref, b_ref = refs[idx], refs[idx + 1], refs[idx + 2]
        idx += 3
        h = batch_norm_train(leaky_relu(dense(h, w_ref)), g_ref, b_ref)

    # dense_out (no activation / no batch norm)
    w_out_ref, o_ref = refs[idx], refs[idx + 1]
    o_ref[...] = dense(h, w_out_ref).astype(o_ref.dtype)


def make_ffnn(w_in, g_in, b_in, hidden_params, w_out):
    """Build the model once (weight transpose / pad hoisted out of the forward
    path) and return a jitted forward: x [batch, input_dim] -> [batch, out_dim].

    w_*: PyTorch-layout [out_features, in_features] weights (bias=False).
    g_*/b_*: per-feature gamma/beta, shape (H,) or (1, H).
    hidden_params: list of (w, gamma, beta) tuples for the hidden stack."""

    # ---- one-time parameter preparation (NOT in the per-call path) ----
    def prep_w(w):
        # [out, in] -> transposed, lane-padded f32 [in_pad, out_pad]
        o, i = w.shape
        wt = jnp.asarray(w, jnp.float32).T
        return jnp.pad(wt, ((0, _round_up(i) - i), (0, _round_up(o) - o)))

    def prep_gb(v):
        v = jnp.asarray(v, jnp.float32).reshape(1, -1)
        n = v.shape[1]
        return jnp.pad(v, ((0, 0), (0, _round_up(n) - n)))

    params = [prep_w(w_in), prep_gb(g_in), prep_gb(b_in)]
    dims = [w_in.shape[1], w_in.shape[0]]
    for (w, g, b) in hidden_params:
        params += [prep_w(w), prep_gb(g), prep_gb(b)]
        dims.append(w.shape[0])
    params.append(prep_w(w_out))
    dims.append(w_out.shape[0])
    params = [jax.device_put(p) for p in params]       # materialized once

    num_hidden = len(hidden_params)
    in_dim = w_in.shape[1]
    out_dim = w_out.shape[0]
    in_pad = _round_up(in_dim)
    out_pad = _round_up(out_dim)

    flops_per_row = 2 * sum(dims[i] * dims[i + 1] for i in range(len(dims) - 1))
    bn_features = sum(dims[1:-1])                       # one rsqrt per BN feature
    param_bytes = sum(int(p.size) * p.dtype.itemsize for p in params)

    def forward(x):
        batch = x.shape[0]
        batch_pad = _round_up(batch, 8)                 # full sublane groups
        x_p = jnp.pad(x.astype(jnp.float32),
                      ((0, batch_pad - batch), (0, in_pad - in_dim)))

        args = [x_p] + params
        vmem_bytes = (sum(int(a.size) * a.dtype.itemsize for a in args)
                      + batch_pad * out_pad * 4)

        kernel = functools.partial(_ffnn_kernel, num_hidden, 1.0 / batch)
        cost = pl.CostEstimate(
            flops=batch * flops_per_row,
            transcendentals=bn_features,
            bytes_accessed=param_bytes + batch * (in_dim + out_dim) * 4)

        # Tiny problem: everything fits in VMEM, whole batch in one call so the
        # BatchNorm statistics are the true whole-batch statistics.
        out_padded = pl.pallas_call(
            kernel,
            out_shape=jax.ShapeDtypeStruct((batch_pad, out_pad), jnp.float32),
            in_specs=[pl.BlockSpec(memory_space=pltpu.MemorySpace.VMEM)] * len(args),
            out_specs=pl.BlockSpec(memory_space=pltpu.MemorySpace.VMEM),
            compiler_params=pltpu.CompilerParams(
                # explicit budget with headroom; stays under v7x's 64 MiB VMEM
                vmem_limit_bytes=int(min(max(4 * vmem_bytes, 16 << 20), 48 << 20))),
            cost_estimate=cost,
        )(*args)
        return out_padded[:batch, :out_dim]

    return jax.jit(forward)


def _reference(x, w_in, g_in, b_in, hidden_params, w_out):
    # Pure-JAX reference mirroring the PyTorch module (f32 matmuls, training-
    # mode BatchNorm1d with biased batch variance).
    def dense(h, w):
        return jnp.dot(h, jnp.asarray(w, jnp.float32).T,
                       preferred_element_type=jnp.float32,
                       precision=jax.lax.Precision.HIGHEST)

    def leaky_relu(h):
        return jnp.maximum(h, NEG_SLOPE * h)

    def bn(h, g, b):
        g = jnp.asarray(g, jnp.float32).reshape(1, -1)
        b = jnp.asarray(b, jnp.float32).reshape(1, -1)
        mean = jnp.mean(h, axis=0, keepdims=True)
        var = jnp.mean(jnp.square(h - mean), axis=0, keepdims=True)
        return g * (h - mean) * jax.lax.rsqrt(var + BN_EPS) + b

    h = bn(leaky_relu(dense(x, w_in)), g_in, b_in)
    for (w, g, b) in hidden_params:
        h = bn(leaky_relu(dense(h, w)), g, b)
    return dense(h, w_out)


if __name__ == "__main__":
    # Module hyperparameters (small, consistent with the forward pass).
    batch = 8
    input_dim = 32
    hidden_neurons = [64, 64]
    output_dim = 16

    key = jax.random.PRNGKey(0)
    ks = jax.random.split(key, 12)

    x = jax.random.normal(ks[0], (batch, input_dim), dtype=jnp.float32)

    # dense_in: [hidden[0], input_dim]   (Linear bias=False)
    w_in = jax.random.normal(ks[1], (hidden_neurons[0], input_dim),
                             dtype=jnp.float32) * 0.1
    # batch_norm_in affine params (random to exercise the affine path)
    g_in = 1.0 + 0.1 * jax.random.normal(ks[2], (hidden_neurons[0],), dtype=jnp.float32)
    b_in = 0.1 * jax.random.normal(ks[3], (hidden_neurons[0],), dtype=jnp.float32)

    # hidden dense layers + batch norms
    hidden_params = []
    for i in range(len(hidden_neurons) - 1):
        w = jax.random.normal(
            ks[4 + 3 * i], (hidden_neurons[i + 1], hidden_neurons[i]),
            dtype=jnp.float32) * 0.1
        g = 1.0 + 0.1 * jax.random.normal(ks[5 + 3 * i], (hidden_neurons[i + 1],),
                                          dtype=jnp.float32)
        b = 0.1 * jax.random.normal(ks[6 + 3 * i], (hidden_neurons[i + 1],),
                                    dtype=jnp.float32)
        hidden_params.append((w, g, b))

    # dense_out: [output_dim, hidden[-1]]
    w_out = jax.random.normal(ks[11], (output_dim, hidden_neurons[-1]),
                              dtype=jnp.float32) * 0.1

    # Build once (weight prep hoisted), then call the jitted forward.
    ffnn = make_ffnn(w_in, g_in, b_in, hidden_params, w_out)
    out = jax.block_until_ready(ffnn(x))
    # second call exercises the cached/compiled path (no weight re-prep)
    out = jax.block_until_ready(ffnn(x))

    ref = _reference(x, w_in, g_in, b_in, hidden_params, w_out)
    assert out.shape == (batch, output_dim)
    assert jnp.allclose(out, ref, atol=1e-3, rtol=1e-3), \
        f"max abs diff {jnp.max(jnp.abs(out - ref))}"

    print("KERNEL_OK")
</pallas_src>

<mosaic_0001>
module attributes {stable_mosaic.version = 11 : i64} {
  func.func @_ffnn_kernel(%arg0: memref<8x128xf32, #tpu.memory_space<vmem>>, %arg1: memref<128x128xf32, #tpu.memory_space<vmem>>, %arg2: memref<1x128xf32, #tpu.memory_space<vmem>>, %arg3: memref<1x128xf32, #tpu.memory_space<vmem>>, %arg4: memref<128x128xf32, #tpu.memory_space<vmem>>, %arg5: memref<1x128xf32, #tpu.memory_space<vmem>>, %arg6: memref<1x128xf32, #tpu.memory_space<vmem>>, %arg7: memref<128x128xf32, #tpu.memory_space<vmem>>, %arg8: memref<8x128xf32, #tpu.memory_space<vmem>>) attributes {dimension_semantics = [], scalar_prefetch = 0 : i64, scratch_operands = 0 : i64, tpu.core_type = #tpu.core_type<tc>} {
    %c0 = arith.constant 0 : index
    %c0_0 = arith.constant 0 : index
    %0 = vector.load %arg0[%c0, %c0_0] : memref<8x128xf32, #tpu.memory_space<vmem>>, vector<8x128xf32>
    %c0_1 = arith.constant 0 : index
    %c0_2 = arith.constant 0 : index
    %1 = vector.load %arg1[%c0_1, %c0_2] : memref<128x128xf32, #tpu.memory_space<vmem>>, vector<128x128xf32>
    %cst = arith.constant dense<0.000000e+00> : vector<8x128xf32>
    %2 = tpu.matmul %0, %1, %cst {dimension_numbers = #tpu.dot_dimension_numbers<[1], [0], [0], [1], [0, 0, 1, 1], [], []>} : vector<8x128xf32>, vector<128x128xf32>, vector<8x128xf32> -> vector<8x128xf32>
    %cst_3 = arith.constant 0.00999999977 : f32
    %3 = vector.broadcast %cst_3 : f32 to vector<8x128xf32>
    %4 = arith.mulf %3, %2 : vector<8x128xf32>
    %5 = arith.maximumf %2, %4 : vector<8x128xf32>
    %6 = arith.mulf %5, %5 : vector<8x128xf32>
    %7 = tpu.concatenate %5, %6 in 1 : vector<8x128xf32>, vector<8x128xf32> -> vector<8x256xf32>
    %cst_4 = arith.constant dense<0.000000e+00> : vector<256xf32>
    %8 = vector.multi_reduction <add>, %7, %cst_4 [0] : vector<8x256xf32> to vector<256xf32>
    %9 = vector.shape_cast %8 : vector<256xf32> to vector<1x256xf32>
    %10 = vector.extract_strided_slice %9 {offsets = [0, 0], sizes = [1, 128], strides = [1, 1]} : vector<1x256xf32> to vector<1x128xf32>
    %cst_5 = arith.constant 1.250000e-01 : f32
    %11 = vector.broadcast %cst_5 : f32 to vector<1x128xf32>
    %12 = arith.mulf %10, %11 : vector<1x128xf32>
    %13 = vector.extract_strided_slice %9 {offsets = [0, 128], sizes = [1, 128], strides = [1, 1]} : vector<1x256xf32> to vector<1x128xf32>
    %cst_6 = arith.constant 1.250000e-01 : f32
    %14 = vector.broadcast %cst_6 : f32 to vector<1x128xf32>
    %15 = arith.mulf %13, %14 : vector<1x128xf32>
    %16 = arith.mulf %12, %12 : vector<1x128xf32>
    %17 = arith.subf %15, %16 : vector<1x128xf32>
    %c0_7 = arith.constant 0 : index
    %c0_8 = arith.constant 0 : index
    %18 = vector.load %arg2[%c0_7, %c0_8] : memref<1x128xf32, #tpu.memory_space<vmem>>, vector<1x128xf32>
    %cst_9 = arith.constant 9.99999974E-6 : f32
    %19 = vector.broadcast %cst_9 : f32 to vector<1x128xf32>
    %20 = arith.addf %17, %19 : vector<1x128xf32>
    %21 = math.rsqrt %20 : vector<1x128xf32>
    %22 = arith.mulf %18, %21 : vector<1x128xf32>
    %c0_10 = arith.constant 0 : index
    %c0_11 = arith.constant 0 : index
    %23 = vector.load %arg3[%c0_10, %c0_11] : memref<1x128xf32, #tpu.memory_space<vmem>>, vector<1x128xf32>
    %24 = arith.mulf %12, %22 : vector<1x128xf32>
    %25 = arith.subf %23, %24 : vector<1x128xf32>
    %26 = vector.broadcast %22 : vector<1x128xf32> to vector<8x128xf32>
    %27 = arith.mulf %5, %26 : vector<8x128xf32>
    %28 = vector.broadcast %25 : vector<1x128xf32> to vector<8x128xf32>
    %29 = arith.addf %27, %28 : vector<8x128xf32>
    %c0_12 = arith.constant 0 : index
    %c0_13 = arith.constant 0 : index
    %30 = vector.load %arg4[%c0_12, %c0_13] : memref<128x128xf32, #tpu.memory_space<vmem>>, vector<128x128xf32>
    %cst_14 = arith.constant dense<0.000000e+00> : vector<8x128xf32>
    %31 = tpu.matmul %29, %30, %cst_14 {dimension_numbers = #tpu.dot_dimension_numbers<[1], [0], [0], [1], [0, 0, 1, 1], [], []>} : vector<8x128xf32>, vector<128x128xf32>, vector<8x128xf32> -> vector<8x128xf32>
    %cst_15 = arith.constant 0.00999999977 : f32
    %32 = vector.broadcast %cst_15 : f32 to vector<8x128xf32>
    %33 = arith.mulf %32, %31 : vector<8x128xf32>
    %34 = arith.maximumf %31, %33 : vector<8x128xf32>
    %35 = arith.mulf %34, %34 : vector<8x128xf32>
    %36 = tpu.concatenate %34, %35 in 1 : vector<8x128xf32>, vector<8x128xf32> -> vector<8x256xf32>
    %cst_16 = arith.constant dense<0.000000e+00> : vector<256xf32>
    %37 = vector.multi_reduction <add>, %36, %cst_16 [0] : vector<8x256xf32> to vector<256xf32>
    %38 = vector.shape_cast %37 : vector<256xf32> to vector<1x256xf32>
    %39 = vector.extract_strided_slice %38 {offsets = [0, 0], sizes = [1, 128], strides = [1, 1]} : vector<1x256xf32> to vector<1x128xf32>
    %cst_17 = arith.constant 1.250000e-01 : f32
    %40 = vector.broadcast %cst_17 : f32 to vector<1x128xf32>
    %41 = arith.mulf %39, %40 : vector<1x128xf32>
    %42 = vector.extract_strided_slice %38 {offsets = [0, 128], sizes = [1, 128], strides = [1, 1]} : vector<1x256xf32> to vector<1x128xf32>
    %cst_18 = arith.constant 1.250000e-01 : f32
    %43 = vector.broadcast %cst_18 : f32 to vector<1x128xf32>
    %44 = arith.mulf %42, %43 : vector<1x128xf32>
    %45 = arith.mulf %41, %41 : vector<1x128xf32>
    %46 = arith.subf %44, %45 : vector<1x128xf32>
    %c0_19 = arith.constant 0 : index
    %c0_20 = arith.constant 0 : index
    %47 = vector.load %arg5[%c0_19, %c0_20] : memref<1x128xf32, #tpu.memory_space<vmem>>, vector<1x128xf32>
    %cst_21 = arith.constant 9.99999974E-6 : f32
    %48 = vector.broadcast %cst_21 : f32 to vector<1x128xf32>
    %49 = arith.addf %46, %48 : vector<1x128xf32>
    %50 = math.rsqrt %49 : vector<1x128xf32>
    %51 = arith.mulf %47, %50 : vector<1x128xf32>
    %c0_22 = arith.constant 0 : index
    %c0_23 = arith.constant 0 : index
    %52 = vector.load %arg6[%c0_22, %c0_23] : memref<1x128xf32, #tpu.memory_space<vmem>>, vector<1x128xf32>
    %53 = arith.mulf %41, %51 : vector<1x128xf32>
    %54 = arith.subf %52, %53 : vector<1x128xf32>
    %55 = vector.broadcast %51 : vector<1x128xf32> to vector<8x128xf32>
    %56 = arith.mulf %34, %55 : vector<8x128xf32>
    %57 = vector.broadcast %54 : vector<1x128xf32> to vector<8x128xf32>
    %58 = arith.addf %56, %57 : vector<8x128xf32>
    %c0_24 = arith.constant 0 : index
    %c0_25 = arith.constant 0 : index
    %59 = vector.load %arg7[%c0_24, %c0_25] : memref<128x128xf32, #tpu.memory_space<vmem>>, vector<128x128xf32>
    %cst_26 = arith.constant dense<0.000000e+00> : vector<8x128xf32>
    %60 = tpu.matmul %58, %59, %cst_26 {dimension_numbers = #tpu.dot_dimension_numbers<[1], [0], [0], [1], [0, 0, 1, 1], [], []>} : vector<8x128xf32>, vector<128x128xf32>, vector<8x128xf32> -> vector<8x128xf32>
    %c0_27 = arith.constant 0 : index
    %c0_28 = arith.constant 0 : index
    %61 = vector.load %arg8[%c0_27, %c0_28] : memref<8x128xf32, #tpu.memory_space<vmem>>, vector<8x128xf32>
    tpu.vector_store %arg8[%c0_27, %c0_28], %60 {strides = array<i32>} : memref<8x128xf32, #tpu.memory_space<vmem>>, vector<8x128xf32>,
    return
  }
}

</mosaic_0001>

<llo_original>
// kernel: forward.1
$region0: #{forward.1}
  #allocation0 [shape = 'u32[]', space=smem, size = 0x4, offset = 0x4, fixed_abs, tag = 'smem constant byte address 0x4 - core index']
  #allocation1 [shape = 'u32[144,128]{1,0:T(1,128)}', space=vmem, size = 0x12000, scoped, tag = 'internal scratch']
  %s0 = inlined_call_operand.vmem [shape: f32[8,128], index: 0, kind: input, shape index: {}]
  %s1 = inlined_call_operand.hbm [shape: f32[128,128], index: 1, kind: input, shape index: {}]
  %s2 = inlined_call_operand.vmem [shape: f32[1,128], index: 2, kind: input, shape index: {}]
  %s3 = inlined_call_operand.vmem [shape: f32[1,128], index: 3, kind: input, shape index: {}]
  %s4 = inlined_call_operand.hbm [shape: f32[128,128], index: 4, kind: input, shape index: {}]
  %s5 = inlined_call_operand.vmem [shape: f32[1,128], index: 5, kind: input, shape index: {}]
  %s6 = inlined_call_operand.vmem [shape: f32[1,128], index: 6, kind: input, shape index: {}]
  %s7 = inlined_call_operand.hbm [shape: f32[128,128], index: 7, kind: input, shape index: {}]
  %s8 = inlined_call_operand.hbm [shape: f32[8,128], index: 8, kind: output, shape index: {}]
  %s9 = sld [smem:[#allocation0]]
  $region54: #{forward.1} parent=0
    _
  %s11 = ssub.s32 1, %s9
  %s12 = scalar_select 0, %s11, %s9
  $region1: #{forward.1} parent=0
    #allocation2 [shape = 'u8[65536]{0}', space=vmem, size = 0x10000, scoped, tag = 'input window, operand 1, single buffered']
    #allocation3 [shape = 's32[1]{0}', space=sflag, size = 0x4, scoped, tag = 'scoped memory for forward.1']
    #allocation4 [shape = 's32[1]{0}', space=sflag, size = 0x4, scoped, tag = 'scoped memory for forward.1']
    #allocation5 [shape = 'u8[65536]{0}', space=vmem, size = 0x10000, scoped, tag = 'input window, operand 4, single buffered']
    #allocation6 [shape = 's32[1]{0}', space=sflag, size = 0x4, scoped, tag = 'scoped memory for forward.1']
    #allocation7 [shape = 'u8[65536]{0}', space=vmem, size = 0x10000, scoped, tag = 'input window, operand 7, single buffered']
    #allocation8 [shape = 'u8[4096]{0}', space=vmem, size = 0x1000, scoped, tag = 'output window, operand 0, single buffered']
    %13 = vsyncpa [#allocation3], 0
    %14 = vsyncpa [#allocation6], 0
    %15 = vsyncpa [#allocation4], 0
    // Predicated region
    $region2: #{forward.1} parent=1 // pred_check
      _
    $region3: #{forward.1} parent=1 // pred_check_branch
      %17 = sbr.rel (0) target = $region5
    $region4: #{forward.1} parent=1 // pred_region
      _
    $region5: #{forward.1} parent=1 // pred_fallthru
      _
    // Predicated region
    $region6: #{forward.1} parent=1 // pred_check
      _
    $region7: #{forward.1} parent=1 // pred_check_branch
      %19 = sbr.rel (0) target = $region9
    $region8: #{forward.1} parent=1 // pred_region
      %s21 = ssub.s32 2048, 2048
      %22 = vsyncadd [#allocation3], %s21
      %s23 = sshll.u32 [#allocation2], 4
      %s24 = int_to_ptr.vmem [resolvable:$true] %s23
      %29 = dma.hbm_to_vmem [thread:$0]  %s1, 2048, %s24, [#allocation3], 128, 128, 8
    $region9: #{forward.1} parent=1 // pred_fallthru
      _
    // Predicated region
    $region10: #{forward.1} parent=1 // pred_check
      _
    $region11: #{forward.1} parent=1 // pred_check_branch
      %31 = sbr.rel (0) target = $region13
    $region12: #{forward.1} parent=1 // pred_region
      _
    $region13: #{forward.1} parent=1 // pred_fallthru
      _
    // Predicated region
    $region14: #{forward.1} parent=1 // pred_check
      _
    $region15: #{forward.1} parent=1 // pred_check_branch
      %33 = sbr.rel (0) target = $region17
    $region16: #{forward.1} parent=1 // pred_region
      _
    $region17: #{forward.1} parent=1 // pred_fallthru
      _
    // Predicated region
    $region18: #{forward.1} parent=1 // pred_check
      _
    $region19: #{forward.1} parent=1 // pred_check_branch
      %35 = sbr.rel (0) target = $region21
    $region20: #{forward.1} parent=1 // pred_region
      %s37 = ssub.s32 2048, 2048
      %38 = vsyncadd [#allocation6], %s37
      %s39 = sshll.u32 [#allocation5], 4
      %s40 = int_to_ptr.vmem [resolvable:$true] %s39
      %45 = dma.hbm_to_vmem [thread:$0]  %s4, 2048, %s40, [#allocation6], 128, 128, 8
    $region21: #{forward.1} parent=1 // pred_fallthru
      _
    // Predicated region
    $region22: #{forward.1} parent=1 // pred_check
      _
    $region23: #{forward.1} parent=1 // pred_check_branch
      %47 = sbr.rel (0) target = $region25
    $region24: #{forward.1} parent=1 // pred_region
      _
    $region25: #{forward.1} parent=1 // pred_fallthru
      _
    // Predicated region
    $region26: #{forward.1} parent=1 // pred_check
      _
    $region27: #{forward.1} parent=1 // pred_check_branch
      %49 = sbr.rel (0) target = $region29
    $region28: #{forward.1} parent=1 // pred_region
      _
    $region29: #{forward.1} parent=1 // pred_fallthru
      _
    // Predicated region
    $region30: #{forward.1} parent=1 // pred_check
      _
    $region31: #{forward.1} parent=1 // pred_check_branch
      %51 = sbr.rel (0) target = $region33
    $region32: #{forward.1} parent=1 // pred_region
      %s53 = ssub.s32 2048, 2048
      %54 = vsyncadd [#allocation6], %s53
      %s55 = sshll.u32 [#allocation7], 4
      %s56 = int_to_ptr.vmem [resolvable:$true] %s55
      %61 = dma.hbm_to_vmem [thread:$0]  %s7, 2048, %s56, [#allocation6], 128, 128, 8
    $region33: #{forward.1} parent=1 // pred_fallthru
      _
    // Predicated region
    $region34: #{forward.1} parent=1 // pred_check
      _
    $region35: #{forward.1} parent=1 // pred_check_branch
      %63 = sbr.rel (0) target = $region37
    $region36: #{forward.1} parent=1 // pred_region
      %64 = dma.done [#allocation3], 2048
    $region37: #{forward.1} parent=1 // pred_fallthru
      _
    // Predicated region
    $region38: #{forward.1} parent=1 // pred_check
      _
    $region39: #{forward.1} parent=1 // pred_check_branch
      %66 = sbr.rel (0) target = $region41
    $region40: #{forward.1} parent=1 // pred_region
      %67 = dma.done [#allocation6], 2048
    $region41: #{forward.1} parent=1 // pred_fallthru
      _
    // Predicated region
    $region42: #{forward.1} parent=1 // pred_check
      _
    $region43: #{forward.1} parent=1 // pred_check_branch
      %69 = sbr.rel (0) target = $region45
    $region44: #{forward.1} parent=1 // pred_region
      %70 = dma.done [#allocation6], 2048
    $region45: #{forward.1} parent=1 // pred_fallthru
      _
    %v71 = vld [vmem:[%s0] sm:$0xff]
    %v72 = vld [vmem:[#allocation2] sm:$0xff]
    %v73 = vld [vmem:[#allocation2 + $0x8] sm:$0xff]
    %v74 = vld [vmem:[#allocation2 + $0x10] sm:$0xff]
    %v75 = vld [vmem:[#allocation2 + $0x18] sm:$0xff]
    %v76 = vld [vmem:[#allocation2 + $0x20] sm:$0xff]
    %v77 = vld [vmem:[#allocation2 + $0x28] sm:$0xff]
    %v78 = vld [vmem:[#allocation2 + $0x30] sm:$0xff]
    %v79 = vld [vmem:[#allocation2 + $0x38] sm:$0xff]
    %v80 = vld [vmem:[#allocation2 + $0x40] sm:$0xff]
    %v81 = vld [vmem:[#allocation2 + $0x48] sm:$0xff]
    %v82 = vld [vmem:[#allocation2 + $0x50] sm:$0xff]
    %v83 = vld [vmem:[#allocation2 + $0x58] sm:$0xff]
    %v84 = vld [vmem:[#allocation2 + $0x60] sm:$0xff]
    %v85 = vld [vmem:[#allocation2 + $0x68] sm:$0xff]
    %v86 = vld [vmem:[#allocation2 + $0x70] sm:$0xff]
    %v87 = vld [vmem:[#allocation2 + $0x78] sm:$0xff]
    %88 = vmatprep.subr.mxu0 0.0
    %89 = vmatpush1.msra.mxu0 %v72
    %90 = vmatprep.subr.mxu0 0.0
    %91 = vmatpush1.msra.mxu0 %v73
    %92 = vmatprep.subr.mxu0 0.0
    %93 = vmatpush1.msra.mxu0 %v74
    %94 = vmatprep.subr.mxu0 0.0
    %95 = vmatpush1.msra.mxu0 %v75
    %96 = vmatprep.subr.mxu0 0.0
    %97 = vmatpush1.msra.mxu0 %v76
    %98 = vmatprep.subr.mxu0 0.0
    %99 = vmatpush1.msra.mxu0 %v77
    %100 = vmatprep.subr.mxu0 0.0
    %101 = vmatpush1.msra.mxu0 %v78
    %102 = vmatprep.subr.mxu0 0.0
    %103 = vmatpush1.msra.mxu0 %v79
    %104 = vmatprep.subr.mxu0 0.0
    %105 = vmatpush1.msra.mxu0 %v80
    %106 = vmatprep.subr.mxu0 0.0
    %107 = vmatpush1.msra.mxu0 %v81
    %108 = vmatprep.subr.mxu0 0.0
    %109 = vmatpush1.msra.mxu0 %v82
    %110 = vmatprep.subr.mxu0 0.0
    %111 = vmatpush1.msra.mxu0 %v83
    %112 = vmatprep.subr.mxu0 0.0
    %113 = vmatpush1.msra.mxu0 %v84
    %114 = vmatprep.subr.mxu0 0.0
    %115 = vmatpush1.msra.mxu0 %v85
    %116 = vmatprep.subr.mxu0 0.0
    %117 = vmatpush1.msra.mxu0 %v86
    %118 = vmatprep.subr.mxu0 0.0
    %119 = vmatpush1.msra.mxu0 %v87
    %120 = vmatprep.subr.mxu0 0.0
    %121 = vmatpush1.msra.mxu0 0.0
    %122 = vmatprep.subr.mxu0 0.0
    %123 = vmatpush1.msra.mxu0 0.0
    %124 = vmatprep.subr.mxu0 0.0
    %125 = vmatpush1.msra.mxu0 0.0
    %126 = vmatprep.subr.mxu0 0.0
    %127 = vmatpush1.msra.mxu0 0.0
    %128 = vmatprep.subr.mxu0 0.0
    %129 = vmatpush1.msra.mxu0 0.0
    %130 = vmatprep.subr.mxu0 0.0
    %131 = vmatpush1.msra.mxu0 0.0
    %132 = vmatprep.subr.mxu0 0.0
    %133 = vmatpush1.msra.mxu0 0.0
    %134 = vmatprep.subr.mxu0 0.0
    %135 = vmatpush1.msra.mxu0 0.0
    %136 = vmatprep.subr.mxu0 0.0
    %137 = vmatpush1.msra.mxu0 0.0
    %138 = vmatprep.subr.mxu0 0.0
    %139 = vmatpush1.msra.mxu0 0.0
    %140 = vmatprep.subr.mxu0 0.0
    %141 = vmatpush1.msra.mxu0 0.0
    %142 = vmatprep.subr.mxu0 0.0
    %143 = vmatpush1.msra.mxu0 0.0
    %144 = vmatprep.subr.mxu0 0.0
    %145 = vmatpush1.msra.mxu0 0.0
    %146 = vmatprep.subr.mxu0 0.0
    %147 = vmatpush1.msra.mxu0 0.0
    %148 = vmatprep.subr.mxu0 0.0
    %149 = vmatpush1.msra.mxu0 0.0
    %150 = vmatprep.subr.mxu0 0.0
    %151 = vmatpush1.msra.mxu0 0.0
    %152 = vmatprep.mubr.f32.mxu0 0.0
    %153 = vmatmul.mubr.f32.gmra.mrb[0].mxu0 %v71
    %v154 = vpop.f32.mrb[0].mxu0
    %v155 = vadd.f32 0.0, %v154
    %v156 = vpop.f32.mrb[0].mxu0
    %157 = vdwg.mxu0
    %v158 = vmul.f32 %v155, 0.01
    %v159 = vmax.f32 %v155, %v158
    %v160 = vmul.f32 %v159, %v159
    %v161 = vrot.slane %v159, 4
    %v162 = vadd.f32 %v159, %v161
    %v163 = vrot.slane %v162, 2
    %v164 = vadd.f32 %v162, %v163
    %v165 = vrot.slane %v164, 1
    %v166 = vadd.f32 %v164, %v165
    %v167 = vrot.slane %v160, 4
    %v168 = vadd.f32 %v160, %v167
    %v169 = vrot.slane %v168, 2
    %v170 = vadd.f32 %v168, %v169
    %v171 = vrot.slane %v170, 1
    %v172 = vadd.f32 %v170, %v171
    %v173 = vmul.f32 %v166, 0.125
    %v174 = vmul.f32 %v172, 0.125
    %v175 = vmul.f32 %v173, %v173
    %v176 = vsub.f32 %v174, %v175
    %v177 = vld [vmem:[%s2] sm:$0x1]
    %v178 = vadd.f32 %v176, 1e-05
    %v179 = vrsqrt.pop %v178
    %v180 = vmul.f32 %v177, %v179
    %v181 = vld [vmem:[%s3] sm:$0x1]
    %v182 = vmul.f32 %v173, %v180
    %v183 = vsub.f32 %v181, %v182
    %v185 = vlaneseq
    %v186 = vshrl.u32 %v185, 7
    %v187 = vsub.s32 0, %v186
    %v188 = vrot.slane %v180, %v187
    %v190 = vmul.f32 %v159, %v188
    %v192 = vlaneseq
    %v193 = vshrl.u32 %v192, 7
    %v194 = vsub.s32 0, %v193
    %v195 = vrot.slane %v183, %v194
    %v197 = vadd.f32 %v190, %v195
    %v198 = vld [vmem:[#allocation5] sm:$0xff]
    %v199 = vld [vmem:[#allocation5 + $0x8] sm:$0xff]
    %v200 = vld [vmem:[#allocation5 + $0x10] sm:$0xff]
    %v201 = vld [vmem:[#allocation5 + $0x18] sm:$0xff]
    %v202 = vld [vmem:[#allocation5 + $0x20] sm:$0xff]
    %v203 = vld [vmem:[#allocation5 + $0x28] sm:$0xff]
    %v204 = vld [vmem:[#allocation5 + $0x30] sm:$0xff]
    %v205 = vld [vmem:[#allocation5 + $0x38] sm:$0xff]
    %v206 = vld [vmem:[#allocation5 + $0x40] sm:$0xff]
    %v207 = vld [vmem:[#allocation5 + $0x48] sm:$0xff]
    %v208 = vld [vmem:[#allocation5 + $0x50] sm:$0xff]
    %v209 = vld [vmem:[#allocation5 + $0x58] sm:$0xff]
    %v210 = vld [vmem:[#allocation5 + $0x60] sm:$0xff]
    %v211 = vld [vmem:[#allocation5 + $0x68] sm:$0xff]
    %v212 = vld [vmem:[#allocation5 + $0x70] sm:$0xff]
    %v213 = vld [vmem:[#allocation5 + $0x78] sm:$0xff]
    %214 = vmatprep.subr.mxu0 0.0
    %215 = vmatpush1.msra.mxu0 %v198
    %216 = vmatprep.subr.mxu0 0.0
    %217 = vmatpush1.msra.mxu0 %v199
    %218 = vmatprep.subr.mxu0 0.0
    %219 = vmatpush1.msra.mxu0 %v200
    %220 = vmatprep.subr.mxu0 0.0
    %221 = vmatpush1.msra.mxu0 %v201
    %222 = vmatprep.subr.mxu0 0.0
    %223 = vmatpush1.msra.mxu0 %v202
    %224 = vmatprep.subr.mxu0 0.0
    %225 = vmatpush1.msra.mxu0 %v203
    %226 = vmatprep.subr.mxu0 0.0
    %227 = vmatpush1.msra.mxu0 %v204
    %228 = vmatprep.subr.mxu0 0.0
    %229 = vmatpush1.msra.mxu0 %v205
    %230 = vmatprep.subr.mxu0 0.0
    %231 = vmatpush1.msra.mxu0 %v206
    %232 = vmatprep.subr.mxu0 0.0
    %233 = vmatpush1.msra.mxu0 %v207
    %234 = vmatprep.subr.mxu0 0.0
    %235 = vmatpush1.msra.mxu0 %v208
    %236 = vmatprep.subr.mxu0 0.0
    %237 = vmatpush1.msra.mxu0 %v209
    %238 = vmatprep.subr.mxu0 0.0
    %239 = vmatpush1.msra.mxu0 %v210
    %240 = vmatprep.subr.mxu0 0.0
    %241 = vmatpush1.msra.mxu0 %v211
    %242 = vmatprep.subr.mxu0 0.0
    %243 = vmatpush1.msra.mxu0 %v212
    %244 = vmatprep.subr.mxu0 0.0
    %245 = vmatpush1.msra.mxu0 %v213
    %246 = vmatprep.subr.mxu0 0.0
    %247 = vmatpush1.msra.mxu0 0.0
    %248 = vmatprep.subr.mxu0 0.0
    %249 = vmatpush1.msra.mxu0 0.0
    %250 = vmatprep.subr.mxu0 0.0
    %251 = vmatpush1.msra.mxu0 0.0
    %252 = vmatprep.subr.mxu0 0.0
    %253 = vmatpush1.msra.mxu0 0.0
    %254 = vmatprep.subr.mxu0 0.0
    %255 = vmatpush1.msra.mxu0 0.0
    %256 = vmatprep.subr.mxu0 0.0
    %257 = vmatpush1.msra.mxu0 0.0
    %258 = vmatprep.subr.mxu0 0.0
    %259 = vmatpush1.msra.mxu0 0.0
    %260 = vmatprep.subr.mxu0 0.0
    %261 = vmatpush1.msra.mxu0 0.0
    %262 = vmatprep.subr.mxu0 0.0
    %263 = vmatpush1.msra.mxu0 0.0
    %264 = vmatprep.subr.mxu0 0.0
    %265 = vmatpush1.msra.mxu0 0.0
    %266 = vmatprep.subr.mxu0 0.0
    %267 = vmatpush1.msra.mxu0 0.0
    %268 = vmatprep.subr.mxu0 0.0
    %269 = vmatpush1.msra.mxu0 0.0
    %270 = vmatprep.subr.mxu0 0.0
    %271 = vmatpush1.msra.mxu0 0.0
    %272 = vmatprep.subr.mxu0 0.0
    %273 = vmatpush1.msra.mxu0 0.0
    %274 = vmatprep.subr.mxu0 0.0
    %275 = vmatpush1.msra.mxu0 0.0
    %276 = vmatprep.subr.mxu0 0.0
    %277 = vmatpush1.msra.mxu0 0.0
    %278 = vmatprep.mubr.f32.mxu0 0.0
    %279 = vmatmul.mubr.f32.gmra.mrb[0].mxu0 %v197
    %v280 = vpop.f32.mrb[0].mxu0
    %v281 = vadd.f32 0.0, %v280
    %v282 = vpop.f32.mrb[0].mxu0
    %283 = vdwg.mxu0
    %v284 = vmul.f32 %v281, 0.01
    %v285 = vmax.f32 %v281, %v284
    %v286 = vmul.f32 %v285, %v285
    %v287 = vrot.slane %v285, 4
    %v288 = vadd.f32 %v285, %v287
    %v289 = vrot.slane %v288, 2
    %v290 = vadd.f32 %v288, %v289
    %v291 = vrot.slane %v290, 1
    %v292 = vadd.f32 %v290, %v291
    %v293 = vrot.slane %v286, 4
    %v294 = vadd.f32 %v286, %v293
    %v295 = vrot.slane %v294, 2
    %v296 = vadd.f32 %v294, %v295
    %v297 = vrot.slane %v296, 1
    %v298 = vadd.f32 %v296, %v297
    %v299 = vmul.f32 %v292, 0.125
    %v300 = vmul.f32 %v298, 0.125
    %v301 = vmul.f32 %v299, %v299
    %v302 = vsub.f32 %v300, %v301
    %v303 = vld [vmem:[%s5] sm:$0x1]
    %v304 = vadd.f32 %v302, 1e-05
    %v305 = vrsqrt.pop %v304
    %v306 = vmul.f32 %v303, %v305
    %v307 = vld [vmem:[%s6] sm:$0x1]
    %v308 = vmul.f32 %v299, %v306
    %v309 = vsub.f32 %v307, %v308
    %v311 = vlaneseq
    %v312 = vshrl.u32 %v311, 7
    %v313 = vsub.s32 0, %v312
    %v314 = vrot.slane %v306, %v313
    %v316 = vmul.f32 %v285, %v314
    %v318 = vlaneseq
    %v319 = vshrl.u32 %v318, 7
    %v320 = vsub.s32 0, %v319
    %v321 = vrot.slane %v309, %v320
    %v323 = vadd.f32 %v316, %v321
    %v324 = vld [vmem:[#allocation7] sm:$0xff]
    %v325 = vld [vmem:[#allocation7 + $0x8] sm:$0xff]
    %v326 = vld [vmem:[#allocation7 + $0x10] sm:$0xff]
    %v327 = vld [vmem:[#allocation7 + $0x18] sm:$0xff]
    %v328 = vld [vmem:[#allocation7 + $0x20] sm:$0xff]
    %v329 = vld [vmem:[#allocation7 + $0x28] sm:$0xff]
    %v330 = vld [vmem:[#allocation7 + $0x30] sm:$0xff]
    %v331 = vld [vmem:[#allocation7 + $0x38] sm:$0xff]
    %v332 = vld [vmem:[#allocation7 + $0x40] sm:$0xff]
    %v333 = vld [vmem:[#allocation7 + $0x48] sm:$0xff]
    %v334 = vld [vmem:[#allocation7 + $0x50] sm:$0xff]
    %v335 = vld [vmem:[#allocation7 + $0x58] sm:$0xff]
    %v336 = vld [vmem:[#allocation7 + $0x60] sm:$0xff]
    %v337 = vld [vmem:[#allocation7 + $0x68] sm:$0xff]
    %v338 = vld [vmem:[#allocation7 + $0x70] sm:$0xff]
    %v339 = vld [vmem:[#allocation7 + $0x78] sm:$0xff]
    %340 = vmatprep.subr.mxu0 0.0
    %341 = vmatpush1.msra.mxu0 %v324
    %342 = vmatprep.subr.mxu0 0.0
    %343 = vmatpush1.msra.mxu0 %v325
    %344 = vmatprep.subr.mxu0 0.0
    %345 = vmatpush1.msra.mxu0 %v326
    %346 = vmatprep.subr.mxu0 0.0
    %347 = vmatpush1.msra.mxu0 %v327
    %348 = vmatprep.subr.mxu0 0.0
    %349 = vmatpush1.msra.mxu0 %v328
    %350 = vmatprep.subr.mxu0 0.0
    %351 = vmatpush1.msra.mxu0 %v329
    %352 = vmatprep.subr.mxu0 0.0
    %353 = vmatpush1.msra.mxu0 %v330
    %354 = vmatprep.subr.mxu0 0.0
    %355 = vmatpush1.msra.mxu0 %v331
    %356 = vmatprep.subr.mxu0 0.0
    %357 = vmatpush1.msra.mxu0 %v332
    %358 = vmatprep.subr.mxu0 0.0
    %359 = vmatpush1.msra.mxu0 %v333
    %360 = vmatprep.subr.mxu0 0.0
    %361 = vmatpush1.msra.mxu0 %v334
    %362 = vmatprep.subr.mxu0 0.0
    %363 = vmatpush1.msra.mxu0 %v335
    %364 = vmatprep.subr.mxu0 0.0
    %365 = vmatpush1.msra.mxu0 %v336
    %366 = vmatprep.subr.mxu0 0.0
    %367 = vmatpush1.msra.mxu0 %v337
    %368 = vmatprep.subr.mxu0 0.0
    %369 = vmatpush1.msra.mxu0 %v338
    %370 = vmatprep.subr.mxu0 0.0
    %371 = vmatpush1.msra.mxu0 %v339
    %372 = vmatprep.subr.mxu0 0.0
    %373 = vmatpush1.msra.mxu0 0.0
    %374 = vmatprep.subr.mxu0 0.0
    %375 = vmatpush1.msra.mxu0 0.0
    %376 = vmatprep.subr.mxu0 0.0
    %377 = vmatpush1.msra.mxu0 0.0
    %378 = vmatprep.subr.mxu0 0.0
    %379 = vmatpush1.msra.mxu0 0.0
    %380 = vmatprep.subr.mxu0 0.0
    %381 = vmatpush1.msra.mxu0 0.0
    %382 = vmatprep.subr.mxu0 0.0
    %383 = vmatpush1.msra.mxu0 0.0
    %384 = vmatprep.subr.mxu0 0.0
    %385 = vmatpush1.msra.mxu0 0.0
    %386 = vmatprep.subr.mxu0 0.0
    %387 = vmatpush1.msra.mxu0 0.0
    %388 = vmatprep.subr.mxu0 0.0
    %389 = vmatpush1.msra.mxu0 0.0
    %390 = vmatprep.subr.mxu0 0.0
    %391 = vmatpush1.msra.mxu0 0.0
    %392 = vmatprep.subr.mxu0 0.0
    %393 = vmatpush1.msra.mxu0 0.0
    %394 = vmatprep.subr.mxu0 0.0
    %395 = vmatpush1.msra.mxu0 0.0
    %396 = vmatprep.subr.mxu0 0.0
    %397 = vmatpush1.msra.mxu0 0.0
    %398 = vmatprep.subr.mxu0 0.0
    %399 = vmatpush1.msra.mxu0 0.0
    %400 = vmatprep.subr.mxu0 0.0
    %401 = vmatpush1.msra.mxu0 0.0
    %402 = vmatprep.subr.mxu0 0.0
    %403 = vmatpush1.msra.mxu0 0.0
    %404 = vmatprep.mubr.f32.mxu0 0.0
    %405 = vmatmul.mubr.f32.gmra.mrb[0].mxu0 %v323
    %v406 = vpop.f32.mrb[0].mxu0
    %v407 = vadd.f32 0.0, %v406
    %v408 = vpop.f32.mrb[0].mxu0
    %409 = vdwg.mxu0
    %410 = vst [vmem:[#allocation8] sm:$0xff] %v407
    // Predicated region
    $region46: #{forward.1} parent=1 // pred_check
      _
    $region47: #{forward.1} parent=1 // pred_check_branch
      %412 = sbr.rel (0) target = $region49
    $region48: #{forward.1} parent=1 // pred_region
      %s414 = ssub.s32 128, 128
      %415 = vsyncadd [#allocation4], %s414
      %s417 = sshll.u32 [#allocation8], 4
      %s418 = int_to_ptr.vmem [resolvable:$true] %s417
      %420 = dma.vmem_to_hbm [thread:$0]  %s418, 128, %s8, [#allocation4]
    $region49: #{forward.1} parent=1 // pred_fallthru
      _
    // Predicated region
    $region50: #{forward.1} parent=1 // pred_check
      _
    $region51: #{forward.1} parent=1 // pred_check_branch
      %422 = sbr.rel (0) target = $region53
    $region52: #{forward.1} parent=1 // pred_region
      %423 = dma.done [#allocation4], 128
    $region53: #{forward.1} parent=1 // pred_fallthru
      _
    %424 = vsyncpa [#allocation3], 1
    %425 = vsyncpa [#allocation6], 1
    %426 = vsyncpa [#allocation4], 1

</llo_original>
